<compile_context>
chip_gen: v7x
topology: tpu7x:2x2x1
jax: 0.10.0
libtpu: 0.0.40
codegen_flags: <defaults>
</compile_context>

<pallas_src>
import functools

import jax
import jax.numpy as jnp
from jax.experimental import pallas as pl
from jax.experimental.pallas import tpu as pltpu


def _round_up(x, m):
    return ((x + m - 1) // m) * m


def reasoner_kernel(x_ref, w1_ref, w2_ref, w3_ref, b1_ref, b2_ref, b3_ref,
                    o_ref):
    # In-kernel bf16 cast of the activation tile (x stays f32 in HBM).
    x_bf = x_ref[...].astype(jnp.bfloat16)

    # Layer 1: Linear (bf16 MXU operands, f32 accumulate) + bias + ReLU (f32 VPU).
    h1 = jnp.dot(x_bf, w1_ref[...], preferred_element_type=jnp.float32)
    h1 = jnp.maximum(h1 + b1_ref[...], 0.0)

    # Layer 1_2: Linear + bias + ReLU.
    h2 = jnp.dot(h1.astype(jnp.bfloat16), w2_ref[...],
                 preferred_element_type=jnp.float32)
    h2 = jnp.maximum(h2 + b2_ref[...], 0.0)

    # Layer 2: Linear + bias + Sigmoid.  exp lives on the EUP; the divide goes
    # to the EUP too via approx reciprocal, keeping VALU slots free.
    logits = jnp.dot(h2.astype(jnp.bfloat16), w3_ref[...],
                     preferred_element_type=jnp.float32)
    z = logits + b3_ref[...]
    o_ref[...] = pl.reciprocal(1.0 + jnp.exp(-z), approx=True)


def _choose_tile(batch, tb_req):
    """Pick a batch tile: multiple of 8, as large as possible, but keep the
    grid >=2 steps when the batch allows so both v7x TensorCores get work."""
    bp8 = _round_up(batch, 8)
    tb = min(tb_req, bp8)
    if bp8 >= 16:  # room for at least two multiple-of-8 tiles
        half = _round_up((bp8 + 1) // 2, 8)
        tb = min(tb, half)
    return _round_up(tb, 8)


def reasoner_forward(x, w1, b1, w2, b2, w3, b3, *, tb=4096):
    """Fused 3-layer MLP:  y = sigmoid(relu(relu(x@w1+b1)@w2+b2)@w3+b3).

    Grid iterates over TB-row batch tiles; weights & biases are VMEM-resident
    across the whole grid.  Batch is zero-padded to a multiple of TB and the
    output width is zero-padded to a 128-lane boundary; both paddings are
    dropped on return.
    """
    B, n_in = x.shape
    n_mid = w1.shape[1]
    n_out = w3.shape[1]

    tb = _choose_tile(B, tb)
    Bp = _round_up(B, tb)
    if Bp != B:
        x = jnp.pad(x, ((0, Bp - B), (0, 0)))
    x = x.astype(jnp.float32)

    # Lane-dense output: pad the last matmul's N to a multiple of 128.
    n_out_p = _round_up(n_out, 128)

    # bf16 MXU operands for the weights; f32 biases for the elementwise path.
    w1_bf = w1.astype(jnp.bfloat16)
    w2_bf = w2.astype(jnp.bfloat16)
    w3_bf = jnp.pad(w3, ((0, 0), (0, n_out_p - n_out))).astype(jnp.bfloat16)
    b1_f = b1.reshape(1, n_mid).astype(jnp.float32)
    b2_f = b2.reshape(1, n_mid).astype(jnp.float32)
    b3_f = jnp.pad(b3.reshape(1, n_out),
                   ((0, 0), (0, n_out_p - n_out))).astype(jnp.float32)

    grid = (Bp // tb,)

    flops = 2 * Bp * (n_in * n_mid + n_mid * n_mid + n_mid * n_out_p)
    bytes_accessed = (x.size * 4 + w1_bf.size * 2 + w2_bf.size * 2 +
                      w3_bf.size * 2 + (b1_f.size + b2_f.size + b3_f.size) * 4 +
                      Bp * n_out_p * 4)

    out = pl.pallas_call(
        reasoner_kernel,
        out_shape=jax.ShapeDtypeStruct((Bp, n_out_p), jnp.float32),
        grid=grid,
        in_specs=[
            pl.BlockSpec((tb, n_in), lambda i: (i, 0)),        # x tile (pipelined)
            pl.BlockSpec((n_in, n_mid), lambda i: (0, 0)),     # w1 (resident)
            pl.BlockSpec((n_mid, n_mid), lambda i: (0, 0)),    # w2 (resident)
            pl.BlockSpec((n_mid, n_out_p), lambda i: (0, 0)),  # w3 padded (resident)
            pl.BlockSpec((1, n_mid), lambda i: (0, 0)),        # b1 (resident)
            pl.BlockSpec((1, n_mid), lambda i: (0, 0)),        # b2 (resident)
            pl.BlockSpec((1, n_out_p), lambda i: (0, 0)),      # b3 padded (resident)
        ],
        out_specs=pl.BlockSpec((tb, n_out_p), lambda i: (i, 0)),
        compiler_params=pltpu.CompilerParams(
            dimension_semantics=("parallel",),
        ),
        cost_estimate=pl.CostEstimate(
            flops=flops,
            transcendentals=Bp * n_out_p,
            bytes_accessed=bytes_accessed,
        ),
    )(x, w1_bf, w2_bf, w3_bf, b1_f, b2_f, b3_f)

    # Drop batch padding and the lane-padding of the output columns.
    return out[:B, :n_out]


def init_params(key, n_in, n_mid, n_out):
    """Mirrors Reasoner.init(): weights ~ N(0, 0.1), biases = 0.

    Weights are kept in [in, out] layout (transpose of PyTorch's [out, in]),
    which is mathematically identical for y = x @ W_T + b.
    """
    k1, k2, k3 = jax.random.split(key, 3)
    w1 = 0.1 * jax.random.normal(k1, (n_in, n_mid), dtype=jnp.float32)
    b1 = jnp.zeros((1, n_mid), dtype=jnp.float32)
    w2 = 0.1 * jax.random.normal(k2, (n_mid, n_mid), dtype=jnp.float32)
    b2 = jnp.zeros((1, n_mid), dtype=jnp.float32)
    w3 = 0.1 * jax.random.normal(k3, (n_mid, n_out), dtype=jnp.float32)
    b3 = jnp.zeros((1, n_out), dtype=jnp.float32)
    return w1, b1, w2, b2, w3, b3


if __name__ == "__main__":
    # Shapes consistent with the module: n_in=32, n_mid=64, n_out=16.
    # Batch=256 -> tile chooser picks tb=128 -> 2-step parallel batch grid.
    B, n_in, n_mid, n_out = 256, 32, 64, 16

    key = jax.random.PRNGKey(0)
    kx, kp = jax.random.split(key)
    x = jax.random.normal(kx, (B, n_in), dtype=jnp.float32)
    w1, b1, w2, b2, w3, b3 = init_params(kp, n_in, n_mid, n_out)

    out = reasoner_forward(x, w1, b1, w2, b2, w3, b3)
    out = jax.block_until_ready(out)

    # Pure-JAX f32 reference (kernel uses bf16 MXU operands + approx recip
    # sigmoid -> loosened tolerance).
    h1 = jnp.maximum(x @ w1 + b1, 0.0)
    h2 = jnp.maximum(h1 @ w2 + b2, 0.0)
    ref = jax.nn.sigmoid(h2 @ w3 + b3)
    assert out.shape == (B, n_out)
    assert jnp.allclose(out, ref, atol=2e-2, rtol=2e-2), "mismatch vs reference"

    print("KERNEL_OK")
</pallas_src>

<mosaic_0001>
module attributes {stable_mosaic.version = 11 : i64} {
  func.func @reasoner_kernel(%arg0: i32, %arg1: memref<128x32xf32, #tpu.memory_space<vmem>>, %arg2: memref<32x64xbf16, #tpu.memory_space<vmem>>, %arg3: memref<64x64xbf16, #tpu.memory_space<vmem>>, %arg4: memref<64x128xbf16, #tpu.memory_space<vmem>>, %arg5: memref<1x64xf32, #tpu.memory_space<vmem>>, %arg6: memref<1x64xf32, #tpu.memory_space<vmem>>, %arg7: memref<1x128xf32, #tpu.memory_space<vmem>>, %arg8: memref<128x128xf32, #tpu.memory_space<vmem>>) attributes {dimension_semantics = [#tpu.dimension_semantics<parallel>], iteration_bounds = array<i64: 2>, scalar_prefetch = 0 : i64, scratch_operands = 0 : i64, tpu.core_type = #tpu.core_type<tc>, window_params = [{transform_indices = @transform_0, window_bounds = array<i64: 128, 32>}, {pipeline_mode = #tpu.pipeline_mode<synchronous>, transform_indices = @transform_1, window_bounds = array<i64: 32, 64>}, {pipeline_mode = #tpu.pipeline_mode<synchronous>, transform_indices = @transform_2, window_bounds = array<i64: 64, 64>}, {pipeline_mode = #tpu.pipeline_mode<synchronous>, transform_indices = @transform_3, window_bounds = array<i64: 64, 128>}, {pipeline_mode = #tpu.pipeline_mode<synchronous>, transform_indices = @transform_4, window_bounds = array<i64: 1, 64>}, {pipeline_mode = #tpu.pipeline_mode<synchronous>, transform_indices = @transform_5, window_bounds = array<i64: 1, 64>}, {pipeline_mode = #tpu.pipeline_mode<synchronous>, transform_indices = @transform_6, window_bounds = array<i64: 1, 128>}, {transform_indices = @transform_7, window_bounds = array<i64: 128, 128>}]} {
    %c0 = arith.constant 0 : index
    %c0_0 = arith.constant 0 : index
    %0 = vector.load %arg1[%c0, %c0_0] : memref<128x32xf32, #tpu.memory_space<vmem>>, vector<128x32xf32>
    %1 = arith.truncf %0 : vector<128x32xf32> to vector<128x32xbf16>
    %c0_1 = arith.constant 0 : index
    %c0_2 = arith.constant 0 : index
    %2 = vector.load %arg2[%c0_1, %c0_2] : memref<32x64xbf16, #tpu.memory_space<vmem>>, vector<32x64xbf16>
    %cst = arith.constant dense<0.000000e+00> : vector<128x64xf32>
    %3 = tpu.matmul %1, %2, %cst {dimension_numbers = #tpu.dot_dimension_numbers<[1], [0], [0], [1], [0, 0, 1, 1], [], []>} : vector<128x32xbf16>, vector<32x64xbf16>, vector<128x64xf32> -> vector<128x64xf32>
    %c0_3 = arith.constant 0 : index
    %c0_4 = arith.constant 0 : index
    %4 = vector.load %arg5[%c0_3, %c0_4] : memref<1x64xf32, #tpu.memory_space<vmem>>, vector<1x64xf32>
    %5 = vector.broadcast %4 : vector<1x64xf32> to vector<128x64xf32>
    %6 = arith.addf %3, %5 : vector<128x64xf32>
    %cst_5 = arith.constant 0.000000e+00 : f32
    %7 = vector.broadcast %cst_5 : f32 to vector<128x64xf32>
    %8 = arith.maximumf %6, %7 : vector<128x64xf32>
    %9 = arith.truncf %8 : vector<128x64xf32> to vector<128x64xbf16>
    %c0_6 = arith.constant 0 : index
    %c0_7 = arith.constant 0 : index
    %10 = vector.load %arg3[%c0_6, %c0_7] : memref<64x64xbf16, #tpu.memory_space<vmem>>, vector<64x64xbf16>
    %cst_8 = arith.constant dense<0.000000e+00> : vector<128x64xf32>
    %11 = tpu.matmul %9, %10, %cst_8 {dimension_numbers = #tpu.dot_dimension_numbers<[1], [0], [0], [1], [0, 0, 1, 1], [], []>} : vector<128x64xbf16>, vector<64x64xbf16>, vector<128x64xf32> -> vector<128x64xf32>
    %c0_9 = arith.constant 0 : index
    %c0_10 = arith.constant 0 : index
    %12 = vector.load %arg6[%c0_9, %c0_10] : memref<1x64xf32, #tpu.memory_space<vmem>>, vector<1x64xf32>
    %13 = vector.broadcast %12 : vector<1x64xf32> to vector<128x64xf32>
    %14 = arith.addf %11, %13 : vector<128x64xf32>
    %cst_11 = arith.constant 0.000000e+00 : f32
    %15 = vector.broadcast %cst_11 : f32 to vector<128x64xf32>
    %16 = arith.maximumf %14, %15 : vector<128x64xf32>
    %17 = arith.truncf %16 : vector<128x64xf32> to vector<128x64xbf16>
    %c0_12 = arith.constant 0 : index
    %c0_13 = arith.constant 0 : index
    %18 = vector.load %arg4[%c0_12, %c0_13] : memref<64x128xbf16, #tpu.memory_space<vmem>>, vector<64x128xbf16>
    %cst_14 = arith.constant dense<0.000000e+00> : vector<128x128xf32>
    %19 = tpu.matmul %17, %18, %cst_14 {dimension_numbers = #tpu.dot_dimension_numbers<[1], [0], [0], [1], [0, 0, 1, 1], [], []>} : vector<128x64xbf16>, vector<64x128xbf16>, vector<128x128xf32> -> vector<128x128xf32>
    %c0_15 = arith.constant 0 : index
    %c0_16 = arith.constant 0 : index
    %20 = vector.load %arg7[%c0_15, %c0_16] : memref<1x128xf32, #tpu.memory_space<vmem>>, vector<1x128xf32>
    %21 = vector.broadcast %20 : vector<1x128xf32> to vector<128x128xf32>
    %22 = arith.addf %19, %21 : vector<128x128xf32>
    %cst_17 = arith.constant 0.000000e+00 : f32
    %23 = vector.broadcast %cst_17 : f32 to vector<128x128xf32>
    %24 = arith.subf %23, %22 : vector<128x128xf32>
    %25 = math.exp %24 : vector<128x128xf32>
    %cst_18 = arith.constant 1.000000e+00 : f32
    %26 = vector.broadcast %cst_18 : f32 to vector<128x128xf32>
    %27 = arith.addf %26, %25 : vector<128x128xf32>
    %28 = tpu.reciprocal %27 {approx = true} : vector<128x128xf32> -> vector<128x128xf32>
    %c0_19 = arith.constant 0 : index
    %c0_20 = arith.constant 0 : index
    %29 = vector.load %arg8[%c0_19, %c0_20] : memref<128x128xf32, #tpu.memory_space<vmem>>, vector<128x128xf32>
    tpu.vector_store %arg8[%c0_19, %c0_20], %28 {strides = array<i32>} : memref<128x128xf32, #tpu.memory_space<vmem>>, vector<128x128xf32>,
    return
  }
  func.func @transform_0(%arg0: i32) -> (i32, i32) {
    %c0_i32 = arith.constant 0 : i32
    %c0_i32_0 = arith.constant 0 : i32
    return %arg0, %c0_i32 : i32, i32
  }
  func.func @transform_1(%arg0: i32) -> (i32, i32) {
    %c0_i32 = arith.constant 0 : i32
    %c0_i32_0 = arith.constant 0 : i32
    %c0_i32_1 = arith.constant 0 : i32
    return %c0_i32, %c0_i32_0 : i32, i32
  }
  func.func @transform_2(%arg0: i32) -> (i32, i32) {
    %c0_i32 = arith.constant 0 : i32
    %c0_i32_0 = arith.constant 0 : i32
    %c0_i32_1 = arith.constant 0 : i32
    return %c0_i32, %c0_i32_0 : i32, i32
  }
  func.func @transform_3(%arg0: i32) -> (i32, i32) {
    %c0_i32 = arith.constant 0 : i32
    %c0_i32_0 = arith.constant 0 : i32
    %c0_i32_1 = arith.constant 0 : i32
    return %c0_i32, %c0_i32_0 : i32, i32
  }
  func.func @transform_4(%arg0: i32) -> (i32, i32) {
    %c0_i32 = arith.constant 0 : i32
    %c0_i32_0 = arith.constant 0 : i32
    %c0_i32_1 = arith.constant 0 : i32
    return %c0_i32, %c0_i32_0 : i32, i32
  }
  func.func @transform_5(%arg0: i32) -> (i32, i32) {
    %c0_i32 = arith.constant 0 : i32
    %c0_i32_0 = arith.constant 0 : i32
    %c0_i32_1 = arith.constant 0 : i32
    return %c0_i32, %c0_i32_0 : i32, i32
  }
  func.func @transform_6(%arg0: i32) -> (i32, i32) {
    %c0_i32 = arith.constant 0 : i32
    %c0_i32_0 = arith.constant 0 : i32
    %c0_i32_1 = arith.constant 0 : i32
    return %c0_i32, %c0_i32_0 : i32, i32
  }
  func.func @transform_7(%arg0: i32) -> (i32, i32) {
    %c0_i32 = arith.constant 0 : i32
    %c0_i32_0 = arith.constant 0 : i32
    return %arg0, %c0_i32 : i32, i32
  }
}

</mosaic_0001>

<llo_original>
// kernel: tpu_custom_call.1
$region0: #{tpu_custom_call.1}
  #allocation0 [shape = 'u32[]', space=smem, size = 0x4, offset = 0x4, fixed_abs, tag = 'smem constant byte address 0x4 - core index']
  #allocation1 [shape = 'u32[144,128]{1,0:T(1,128)}', space=vmem, size = 0x12000, scoped, tag = 'internal scratch']
  %s0 = inlined_call_operand.vmem [shape: f32[256,32], index: 0, kind: input, shape index: {}]
  %s1 = inlined_call_operand.vmem [shape: bf16[32,64], index: 1, kind: input, shape index: {}]
  %s2 = inlined_call_operand.vmem [shape: bf16[64,64], index: 2, kind: input, shape index: {}]
  %s3 = inlined_call_operand.vmem [shape: bf16[64,128], index: 3, kind: input, shape index: {}]
  %s4 = inlined_call_operand.vmem [shape: f32[1,64], index: 4, kind: input, shape index: {}]
  %s5 = inlined_call_operand.vmem [shape: f32[1,64], index: 5, kind: input, shape index: {}]
  %s6 = inlined_call_operand.vmem [shape: f32[1,128], index: 6, kind: input, shape index: {}]
  %s7 = inlined_call_operand.hbm [shape: f32[256,128], index: 7, kind: output, shape index: {}]
  %s8 = sld [smem:[#allocation0]]
  $region61: #{tpu_custom_call.1} parent=0
    _
  %s10 = ssub.s32 1, %s8
  %s11 = scalar_select 0, %s10, %s8
  $region1: #{tpu_custom_call.1} parent=0
    #allocation2 [shape = 'u8[131072]{0}', space=vmem, size = 0x20000, scoped, tag = 'output window, operand 0']
    #allocation3 [shape = 's32[2]{0}', space=sflag, size = 0x8, scoped, tag = 'scoped memory for tpu_custom_call.1']
    %12 = vsyncpa [#allocation3], 0
    %s13 = scalar_lea.sflag [#allocation3], 1
    %14 = vsyncpa %s13, 0
    loop: start=0, step=1, limit=4
    $region2: #{tpu_custom_call.1} parent=1 // loop_pre_header
      _
    $region3: #{tpu_custom_call.1} parent=1 // loop_header
      %s16 = sphi 0, %s20
      %p17 = scmp.ge.s32.totalorder %s16, 4
      %s26 = sphi 0, %s28
      %s29 = sphi 0, %s26
      %s30 = sphi 0, %s29
      %s46 = sphi 0, %s30
      %s50 = sphi 0, %s50
      %s52 = sphi 0, %s50
      %s53 = sphi 0, %s52
      %s67 = sphi 0, %s53
      %s71 = sphi 0, %s71
      %s73 = sphi 0, %s71
      %s74 = sphi 0, %s73
      %s88 = sphi 0, %s74
      %s92 = sphi 0, %s92
      %s94 = sphi 0, %s92
      %s95 = sphi 0, %s94
      %s109 = sphi 0, %s95
      %s113 = sphi 0, %s113
      %s115 = sphi 0, %s113
      %s116 = sphi 0, %s115
      %s130 = sphi 0, %s116
      %s134 = sphi 0, %s134
      %s136 = sphi 0, %s134
      %s137 = sphi 0, %s136
      %s151 = sphi 0, %s137
      %s155 = sphi 0, %s155
      %s157 = sphi 0, %s155
      %s158 = sphi 0, %s157
      %s172 = sphi 0, %s158
      %s178 = sphi 0, %s180
      %s181 = sphi 0, %s178
      %s182 = sphi 0, %s181
      %s198 = sphi 0, %s182
    $region4: #{tpu_custom_call.1} parent=1 // loop_header_branch
      %19 = sbr.rel (%p17) target = $region8
    $region5: #{tpu_custom_call.1} parent=1 // loop_body
      %s21 = ssub.s32 %s16, 1
      %s22 = ssub.s32 %s16, 2
      %s23 = sadd.s32 %s16, 1
      %s24 = ssub.s32 %s16, %s23
      %p25 = scmp.eq.s32.totalorder %s24, 0
      %s27 = sadd.s32 %s26, 1
      %s28 = scalar_select %p25, %s26, %s27
      %p31 = pneg %p25
      %p32 = scmp.eq.s32.totalorder %s16, 1
      %p33 = por %p31, %p32
      %p34 = scmp.ne.s32.totalorder %s26, %s29
      %p35 = scmp.eq.s32.totalorder %s16, 0
      %p36 = por %p34, %p35
      %p37 = scmp.ne.s32.totalorder %s26, %s29
      %p38 = scmp.eq.s32.totalorder %s21, 1
      %p39 = por %p37, %p38
      %p40 = scmp.ne.s32.totalorder %s29, %s30
      %p41 = scmp.eq.s32.totalorder %s21, 0
      %p42 = por %p40, %p41
      %p43 = scmp.ne.s32.totalorder %s29, %s30
      %p44 = scmp.eq.s32.totalorder %s22, 1
      %p45 = por %p43, %p44
      %p47 = scmp.ne.s32.totalorder %s30, %s46
      %p48 = scmp.eq.s32.totalorder %s22, 0
      %p49 = por %p47, %p48
      %s51 = sadd.s32 %s50, 1
      %p54 = scmp.eq.s32.totalorder %s16, 1
      %p55 = scmp.ne.s32.totalorder %s50, %s52
      %p56 = scmp.eq.s32.totalorder %s16, 0
      %p57 = por %p55, %p56
      %p58 = scmp.ne.s32.totalorder %s50, %s52
      %p59 = scmp.eq.s32.totalorder %s21, 1
      %p60 = por %p58, %p59
      %p61 = scmp.ne.s32.totalorder %s52, %s53
      %p62 = scmp.eq.s32.totalorder %s21, 0
      %p63 = por %p61, %p62
      %p64 = scmp.ne.s32.totalorder %s52, %s53
      %p65 = scmp.eq.s32.totalorder %s22, 1
      %p66 = por %p64, %p65
      %p68 = scmp.ne.s32.totalorder %s53, %s67
      %p69 = scmp.eq.s32.totalorder %s22, 0
      %p70 = por %p68, %p69
      %s72 = sadd.s32 %s71, 1
      %p75 = scmp.eq.s32.totalorder %s16, 1
      %p76 = scmp.ne.s32.totalorder %s71, %s73
      %p77 = scmp.eq.s32.totalorder %s16, 0
      %p78 = por %p76, %p77
      %p79 = scmp.ne.s32.totalorder %s71, %s73
      %p80 = scmp.eq.s32.totalorder %s21, 1
      %p81 = por %p79, %p80
      %p82 = scmp.ne.s32.totalorder %s73, %s74
      %p83 = scmp.eq.s32.totalorder %s21, 0
      %p84 = por %p82, %p83
      %p85 = scmp.ne.s32.totalorder %s73, %s74
      %p86 = scmp.eq.s32.totalorder %s22, 1
      %p87 = por %p85, %p86
      %p89 = scmp.ne.s32.totalorder %s74, %s88
      %p90 = scmp.eq.s32.totalorder %s22, 0
      %p91 = por %p89, %p90
      %s93 = sadd.s32 %s92, 1
      %p96 = scmp.eq.s32.totalorder %s16, 1
      %p97 = scmp.ne.s32.totalorder %s92, %s94
      %p98 = scmp.eq.s32.totalorder %s16, 0
      %p99 = por %p97, %p98
      %p100 = scmp.ne.s32.totalorder %s92, %s94
      %p101 = scmp.eq.s32.totalorder %s21, 1
      %p102 = por %p100, %p101
      %p103 = scmp.ne.s32.totalorder %s94, %s95
      %p104 = scmp.eq.s32.totalorder %s21, 0
      %p105 = por %p103, %p104
      %p106 = scmp.ne.s32.totalorder %s94, %s95
      %p107 = scmp.eq.s32.totalorder %s22, 1
      %p108 = por %p106, %p107
      %p110 = scmp.ne.s32.totalorder %s95, %s109
      %p111 = scmp.eq.s32.totalorder %s22, 0
      %p112 = por %p110, %p111
      %s114 = sadd.s32 %s113, 1
      %p117 = scmp.eq.s32.totalorder %s16, 1
      %p118 = scmp.ne.s32.totalorder %s113, %s115
      %p119 = scmp.eq.s32.totalorder %s16, 0
      %p120 = por %p118, %p119
      %p121 = scmp.ne.s32.totalorder %s113, %s115
      %p122 = scmp.eq.s32.totalorder %s21, 1
      %p123 = por %p121, %p122
      %p124 = scmp.ne.s32.totalorder %s115, %s116
      %p125 = scmp.eq.s32.totalorder %s21, 0
      %p126 = por %p124, %p125
      %p127 = scmp.ne.s32.totalorder %s115, %s116
      %p128 = scmp.eq.s32.totalorder %s22, 1
      %p129 = por %p127, %p128
      %p131 = scmp.ne.s32.totalorder %s116, %s130
      %p132 = scmp.eq.s32.totalorder %s22, 0
      %p133 = por %p131, %p132
      %s135 = sadd.s32 %s134, 1
      %p138 = scmp.eq.s32.totalorder %s16, 1
      %p139 = scmp.ne.s32.totalorder %s134, %s136
      %p140 = scmp.eq.s32.totalorder %s16, 0
      %p141 = por %p139, %p140
      %p142 = scmp.ne.s32.totalorder %s134, %s136
      %p143 = scmp.eq.s32.totalorder %s21, 1
      %p144 = por %p142, %p143
      %p145 = scmp.ne.s32.totalorder %s136, %s137
      %p146 = scmp.eq.s32.totalorder %s21, 0
      %p147 = por %p145, %p146
      %p148 = scmp.ne.s32.totalorder %s136, %s137
      %p149 = scmp.eq.s32.totalorder %s22, 1
      %p150 = por %p148, %p149
      %p152 = scmp.ne.s32.totalorder %s137, %s151
      %p153 = scmp.eq.s32.totalorder %s22, 0
      %p154 = por %p152, %p153
      %s156 = sadd.s32 %s155, 1
      %p159 = scmp.eq.s32.totalorder %s16, 1
      %p160 = scmp.ne.s32.totalorder %s155, %s157
      %p161 = scmp.eq.s32.totalorder %s16, 0
      %p162 = por %p160, %p161
      %p163 = scmp.ne.s32.totalorder %s155, %s157
      %p164 = scmp.eq.s32.totalorder %s21, 1
      %p165 = por %p163, %p164
      %p166 = scmp.ne.s32.totalorder %s157, %s158
      %p167 = scmp.eq.s32.totalorder %s21, 0
      %p168 = por %p166, %p167
      %p169 = scmp.ne.s32.totalorder %s157, %s158
      %p170 = scmp.eq.s32.totalorder %s22, 1
      %p171 = por %p169, %p170
      %p173 = scmp.ne.s32.totalorder %s158, %s172
      %p174 = scmp.eq.s32.totalorder %s22, 0
      %p175 = por %p173, %p174
      %s176 = ssub.s32 %s16, %s23
      %p177 = scmp.eq.s32.totalorder %s176, 0
      %s179 = sadd.s32 %s178, 1
      %s180 = scalar_select %p177, %s178, %s179
      %p183 = pneg %p177
      %p184 = scmp.eq.s32.totalorder %s16, 1
      %p185 = por %p183, %p184
      %p186 = scmp.ne.s32.totalorder %s178, %s181
      %p187 = scmp.eq.s32.totalorder %s16, 0
      %p188 = por %p186, %p187
      %p189 = scmp.ne.s32.totalorder %s178, %s181
      %p190 = scmp.eq.s32.totalorder %s21, 1
      %p191 = por %p189, %p190
      %p192 = scmp.ne.s32.totalorder %s181, %s182
      %p193 = scmp.eq.s32.totalorder %s21, 0
      %p194 = por %p192, %p193
      %p195 = scmp.ne.s32.totalorder %s181, %s182
      %p196 = scmp.eq.s32.totalorder %s22, 1
      %p197 = por %p195, %p196
      %p199 = scmp.ne.s32.totalorder %s182, %s198
      %p200 = scmp.eq.s32.totalorder %s22, 0
      %p201 = por %p199, %p200
      %p202 = scmp.le.s32.totalorder 1, %s16
      %p203 = scmp.lt.s32.totalorder %s16, 3
      %p204 = pnand %p202, %p203
      %p205 = pneg %p204
      // Predicated region
      $region9: #{tpu_custom_call.1} parent=5 // pred_check
        _
      $region10: #{tpu_custom_call.1} parent=5 // pred_check_branch
        %207 = sbr.rel (%p204) target = $region12
      $region11: #{tpu_custom_call.1} parent=5 // pred_region
        %s208 = ssub.s32 %s16, 1
        // Predicated region
        $region13: #{tpu_custom_call.1} parent=11 // pred_check
          %p209 = pneg %p63
        $region14: #{tpu_custom_call.1} parent=11 // pred_check_branch
          %211 = sbr.rel (%p209) target = $region16
        $region15: #{tpu_custom_call.1} parent=11 // pred_region
          _
        $region16: #{tpu_custom_call.1} parent=11 // pred_fallthru
          _
        // Predicated region
        $region17: #{tpu_custom_call.1} parent=11 // pred_check
          %p212 = pneg %p84
        $region18: #{tpu_custom_call.1} parent=11 // pred_check_branch
          %214 = sbr.rel (%p212) target = $region20
        $region19: #{tpu_custom_call.1} parent=11 // pred_region
          _
        $region20: #{tpu_custom_call.1} parent=11 // pred_fallthru
          _
        // Predicated region
        $region21: #{tpu_custom_call.1} parent=11 // pred_check
          %p215 = pneg %p105
        $region22: #{tpu_custom_call.1} parent=11 // pred_check_branch
          %217 = sbr.rel (%p215) target = $region24
        $region23: #{tpu_custom_call.1} parent=11 // pred_region
          _
        $region24: #{tpu_custom_call.1} parent=11 // pred_fallthru
          _
        // Predicated region
        $region25: #{tpu_custom_call.1} parent=11 // pred_check
          %p218 = pneg %p126
        $region26: #{tpu_custom_call.1} parent=11 // pred_check_branch
          %220 = sbr.rel (%p218) target = $region28
        $region27: #{tpu_custom_call.1} parent=11 // pred_region
          _
        $region28: #{tpu_custom_call.1} parent=11 // pred_fallthru
          _
        // Predicated region
        $region29: #{tpu_custom_call.1} parent=11 // pred_check
          %p221 = pneg %p147
        $region30: #{tpu_custom_call.1} parent=11 // pred_check_branch
          %223 = sbr.rel (%p221) target = $region32
        $region31: #{tpu_custom_call.1} parent=11 // pred_region
          _
        $region32: #{tpu_custom_call.1} parent=11 // pred_fallthru
          _
        // Predicated region
        $region33: #{tpu_custom_call.1} parent=11 // pred_check
          %p224 = pneg %p168
        $region34: #{tpu_custom_call.1} parent=11 // pred_check_branch
          %226 = sbr.rel (%p224) target = $region36
        $region35: #{tpu_custom_call.1} parent=11 // pred_region
          _
        $region36: #{tpu_custom_call.1} parent=11 // pred_fallthru
          _
      $region12: #{tpu_custom_call.1} parent=5 // pred_fallthru
        _
      %p227 = scmp.lt.s32.totalorder %s16, 2
      // Predicated region
      $region37: #{tpu_custom_call.1} parent=5 // pred_check
        %p228 = pneg %p227
      $region38: #{tpu_custom_call.1} parent=5 // pred_check_branch
        %230 = sbr.rel (%p228) target = $region40
      $region39: #{tpu_custom_call.1} parent=5 // pred_region
        // Predicated region
        $region41: #{tpu_custom_call.1} parent=39 // pred_check
          %p231 = pneg %p36
        $region42: #{tpu_custom_call.1} parent=39 // pred_check_branch
          %233 = sbr.rel (%p231) target = $region44
        $region43: #{tpu_custom_call.1} parent=39 // pred_region
          %s234 = smul.u32 16, %s16
          %p235 = scmp.lt.s32.totalorder %s234, 31
          %s236 = scalar_select %p235, %s234, 31
          %s237 = smul.addr %s236, 8
          %s238 = scalar_lea.vmem %s0, %s237
          %s239 = smul.u32 16, %s16
        $region44: #{tpu_custom_call.1} parent=39 // pred_fallthru
          _
      $region40: #{tpu_custom_call.1} parent=5 // pred_fallthru
        _
      %p240 = scmp.le.s32.totalorder 1, %s16
      %p241 = scmp.lt.s32.totalorder %s16, 3
      %p242 = pnand %p240, %p241
      %p243 = pneg %p242
      // Predicated region
      $region45: #{tpu_custom_call.1} parent=5 // pred_check
        _
      $region46: #{tpu_custom_call.1} parent=5 // pred_check_branch
        %245 = sbr.rel (%p242) target = $region48
      $region47: #{tpu_custom_call.1} parent=5 // pred_region
        %s246 = ssub.s32 %s16, 1
        %s247 = smul.u32 16, %s21
        %p248 = scmp.lt.s32.totalorder %s247, 31
        %s249 = scalar_select %p248, %s247, 31
        %s250 = smul.addr %s249, 8
        %s251 = scalar_lea.vmem %s0, %s250
        %p252 = pneg %p42
        %p253 = pneg %p39
        %p254 = pneg %p63
        %p255 = pneg %p60
        %p256 = pneg %p84
        %p257 = pneg %p81
        %p258 = pneg %p105
        %p259 = pneg %p102
        %p260 = pneg %p126
        %p261 = pneg %p123
        %p262 = pneg %p147
        %p263 = pneg %p144
        %p264 = pneg %p168
        %p265 = pneg %p165
        %p266 = pneg %p194
        %p267 = pneg %p191
        %s268 = sand.u32 %s181, 1
        %s269 = scalar_lea.sflag [#allocation3], %s268
        %s270 = sand.u32 %s181, 1
        %s271 = smul.addr %s270, 128
        %s272 = scalar_lea.vmem [#allocation2], %s271
        %s273 = smul.u32 16, %s21
        %p274 = scmp.lt.s32.totalorder %s273, 31
        %s275 = scalar_select %p274, %s273, 31
        %s276 = smul.addr %s275, 8
        %s277 = scalar_lea.vmem %s0, %s276
        %s278 = smul.u32 16, %s21
        %s279 = smul.u32 16, %s21
        %v281 = vld [vmem:[%s277] sm:$0xff]
        %v282 = vld [vmem:[%s277 + $0x8] sm:$0xff]
        %v283 = vld [vmem:[%s277 + $0x10] sm:$0xff]
        %v284 = vld [vmem:[%s277 + $0x18] sm:$0xff]
        %v285 = vld [vmem:[%s277 + $0x20] sm:$0xff]
        %v286 = vld [vmem:[%s277 + $0x28] sm:$0xff]
        %v287 = vld [vmem:[%s277 + $0x30] sm:$0xff]
        %v288 = vld [vmem:[%s277 + $0x38] sm:$0xff]
        %v289 = vld [vmem:[%s277 + $0x40] sm:$0xff]
        %v290 = vld [vmem:[%s277 + $0x48] sm:$0xff]
        %v291 = vld [vmem:[%s277 + $0x50] sm:$0xff]
        %v292 = vld [vmem:[%s277 + $0x58] sm:$0xff]
        %v293 = vld [vmem:[%s277 + $0x60] sm:$0xff]
        %v294 = vld [vmem:[%s277 + $0x68] sm:$0xff]
        %v295 = vld [vmem:[%s277 + $0x70] sm:$0xff]
        %v296 = vld [vmem:[%s277 + $0x78] sm:$0xff]
        %v297 = vpack.c.bf16 %v282, %v281
        %v298 = vpack.c.bf16 %v284, %v283
        %v299 = vpack.c.bf16 %v286, %v285
        %v300 = vpack.c.bf16 %v288, %v287
        %v301 = vpack.c.bf16 %v290, %v289
        %v302 = vpack.c.bf16 %v292, %v291
        %v303 = vpack.c.bf16 %v294, %v293
        %v304 = vpack.c.bf16 %v296, %v295
        %v305 = vld [vmem:[%s1] sm:$0xf]
        %v306 = vld [vmem:[%s1 + $0x4] sm:$0xf]
        %v307 = vld [vmem:[%s1 + $0x8] sm:$0xf]
        %v308 = vld [vmem:[%s1 + $0xc] sm:$0xf]
        %v309 = vld [vmem:[%s4] sm:$0x1]
        %v311 = vlaneseq
        %v312 = vshrl.u32 %v311, 7
        %v313 = vsub.s32 0, %v312
        %v314 = vrot.slane %v309, %v313
        %v320 = vunpack.c.l.b16 %v305
        %v321 = vunpack.c.l.b16 %v306
        %v322 = vunpack.c.l.b16 %v307
        %v323 = vunpack.c.l.b16 %v308
        %v324 = vpack.c.b16 %v321, %v320
        %v325 = vpack.c.b16 %v323, %v322
        %vm328 = vcmask 261120
        %v330 = vsel %vm328, %v297, 0
        %v333 = vsel %vm328, %v298, 0
        %v336 = vsel %vm328, %v299, 0
        %v339 = vsel %vm328, %v300, 0
        %v342 = vsel %vm328, %v301, 0
        %v345 = vsel %vm328, %v302, 0
        %v348 = vsel %vm328, %v303, 0
        %v351 = vsel %vm328, %v304, 0
        %353 = vmatprep.subr.bf16.mxu0 0
        %354 = vmatpush1.bf16.msra.mxu0 %v324
        %355 = vmatprep.subr.bf16.mxu0 0
        %356 = vmatpush1.bf16.msra.mxu0 %v325
        %357 = vmatprep.subr.bf16.mxu0 0
        %358 = vmatpush1.bf16.msra.mxu0 0
        %359 = vmatprep.subr.bf16.mxu0 0
        %360 = vmatpush1.bf16.msra.mxu0 0
        %361 = vmatprep.subr.bf16.mxu0 0
        %362 = vmatpush1.bf16.msra.mxu0 0
        %363 = vmatprep.subr.bf16.mxu0 0
        %364 = vmatpush1.bf16.msra.mxu0 0
        %365 = vmatprep.subr.bf16.mxu0 0
        %366 = vmatpush1.bf16.msra.mxu0 0
        %367 = vmatprep.subr.bf16.mxu0 0
        %368 = vmatpush1.bf16.msra.mxu0 0
        %369 = vmatprep.subr.bf16.mxu0 0
        %370 = vmatpush1.bf16.msra.mxu0 0
        %371 = vmatprep.subr.bf16.mxu0 0
        %372 = vmatpush1.bf16.msra.mxu0 0
        %373 = vmatprep.subr.bf16.mxu0 0
        %374 = vmatpush1.bf16.msra.mxu0 0
        %375 = vmatprep.subr.bf16.mxu0 0
        %376 = vmatpush1.bf16.msra.mxu0 0
        %377 = vmatprep.subr.bf16.mxu0 0
        %378 = vmatpush1.bf16.msra.mxu0 0
        %379 = vmatprep.subr.bf16.mxu0 0
        %380 = vmatpush1.bf16.msra.mxu0 0
        %381 = vmatprep.subr.bf16.mxu0 0
        %382 = vmatpush1.bf16.msra.mxu0 0
        %383 = vmatprep.subr.bf16.mxu0 0
        %384 = vmatpush1.bf16.msra.mxu0 0
        %385 = vmatprep.mubr.bf16.mxu0 0
        %386 = vmatmul.mubr.bf16.gmra.mrb[0].mxu0 %v330
        %v387 = vpop.f32.mrb[0].mxu0
        %v388 = vadd.f32 %v314, %v387
        %v389 = vpop.f32.mrb[0].mxu0
        %v390 = vpop.f32.mrb[0].mxu0
        %v391 = vadd.f32 %v314, %v390
        %v392 = vpop.f32.mrb[0].mxu0
        %393 = vmatprep.mubr.bf16.mxu0 0
        %394 = vmatmul.mubr.bf16.gmra.mrb[0].mxu0 %v333
        %v395 = vpop.f32.mrb[0].mxu0
        %v396 = vadd.f32 %v314, %v395
        %v397 = vpop.f32.mrb[0].mxu0
        %v398 = vpop.f32.mrb[0].mxu0
        %v399 = vadd.f32 %v314, %v398
        %v400 = vpop.f32.mrb[0].mxu0
        %401 = vmatprep.mubr.bf16.mxu0 0
        %402 = vmatmul.mubr.bf16.gmra.mrb[0].mxu0 %v336
        %v403 = vpop.f32.mrb[0].mxu0
        %v404 = vadd.f32 %v314, %v403
        %v405 = vpop.f32.mrb[0].mxu0
        %v406 = vpop.f32.mrb[0].mxu0
        %v407 = vadd.f32 %v314, %v406
        %v408 = vpop.f32.mrb[0].mxu0
        %409 = vmatprep.mubr.bf16.mxu0 0
        %410 = vmatmul.mubr.bf16.gmra.mrb[0].mxu0 %v339
        %v411 = vpop.f32.mrb[0].mxu0
        %v412 = vadd.f32 %v314, %v411
        %v413 = vpop.f32.mrb[0].mxu0
        %v414 = vpop.f32.mrb[0].mxu0
        %v415 = vadd.f32 %v314, %v414
        %v416 = vpop.f32.mrb[0].mxu0
        %417 = vmatprep.mubr.bf16.mxu0 0
        %418 = vmatmul.mubr.bf16.gmra.mrb[0].mxu0 %v342
        %v419 = vpop.f32.mrb[0].mxu0
        %v420 = vadd.f32 %v314, %v419
        %v421 = vpop.f32.mrb[0].mxu0
        %v422 = vpop.f32.mrb[0].mxu0
        %v423 = vadd.f32 %v314, %v422
        %v424 = vpop.f32.mrb[0].mxu0
        %425 = vmatprep.mubr.bf16.mxu0 0
        %426 = vmatmul.mubr.bf16.gmra.mrb[0].mxu0 %v345
        %v427 = vpop.f32.mrb[0].mxu0
        %v428 = vadd.f32 %v314, %v427
        %v429 = vpop.f32.mrb[0].mxu0
        %v430 = vpop.f32.mrb[0].mxu0
        %v431 = vadd.f32 %v314, %v430
        %v432 = vpop.f32.mrb[0].mxu0
        %433 = vmatprep.mubr.bf16.mxu0 0
        %434 = vmatmul.mubr.bf16.gmra.mrb[0].mxu0 %v348
        %v435 = vpop.f32.mrb[0].mxu0
        %v436 = vadd.f32 %v314, %v435
        %v437 = vpop.f32.mrb[0].mxu0
        %v438 = vpop.f32.mrb[0].mxu0
        %v439 = vadd.f32 %v314, %v438
        %v440 = vpop.f32.mrb[0].mxu0
        %441 = vmatprep.mubr.bf16.mxu0 0
        %442 = vmatmul.mubr.bf16.gmra.mrb[0].mxu0 %v351
        %v443 = vpop.f32.mrb[0].mxu0
        %v444 = vadd.f32 %v314, %v443
        %v445 = vpop.f32.mrb[0].mxu0
        %v446 = vpop.f32.mrb[0].mxu0
        %v447 = vadd.f32 %v314, %v446
        %v448 = vpop.f32.mrb[0].mxu0
        %449 = vdwg.mxu0
        %v450 = vmax.f32 %v388, 0.0
        %v451 = vmax.f32 %v391, 0.0
        %v452 = vmax.f32 %v396, 0.0
        %v453 = vmax.f32 %v399, 0.0
        %v454 = vmax.f32 %v404, 0.0
        %v455 = vmax.f32 %v407, 0.0
        %v456 = vmax.f32 %v412, 0.0
        %v457 = vmax.f32 %v415, 0.0
        %v458 = vmax.f32 %v420, 0.0
        %v459 = vmax.f32 %v423, 0.0
        %v460 = vmax.f32 %v428, 0.0
        %v461 = vmax.f32 %v431, 0.0
        %v462 = vmax.f32 %v436, 0.0
        %v463 = vmax.f32 %v439, 0.0
        %v464 = vmax.f32 %v444, 0.0
        %v465 = vmax.f32 %v447, 0.0
        %v466 = vpack.c.bf16 %v451, %v450
        %v467 = vpack.c.bf16 %v453, %v452
        %v468 = vpack.c.bf16 %v455, %v454
        %v469 = vpack.c.bf16 %v457, %v456
        %v470 = vpack.c.bf16 %v459, %v458
        %v471 = vpack.c.bf16 %v461, %v460
        %v472 = vpack.c.bf16 %v463, %v462
        %v473 = vpack.c.bf16 %v465, %v464
        %v474 = vld [vmem:[%s2] sm:$0xf]
        %v475 = vld [vmem:[%s2 + $0x4] sm:$0xf]
        %v476 = vld [vmem:[%s2 + $0x8] sm:$0xf]
        %v477 = vld [vmem:[%s2 + $0xc] sm:$0xf]
        %v478 = vld [vmem:[%s2 + $0x10] sm:$0xf]
        %v479 = vld [vmem:[%s2 + $0x14] sm:$0xf]
        %v480 = vld [vmem:[%s2 + $0x18] sm:$0xf]
        %v481 = vld [vmem:[%s2 + $0x1c] sm:$0xf]
        %v482 = vld [vmem:[%s5] sm:$0x1]
        %v484 = vlaneseq
        %v485 = vshrl.u32 %v484, 7
        %v486 = vsub.s32 0, %v485
        %v487 = vrot.slane %v482, %v486
        %v497 = vunpack.c.l.b16 %v474
        %v498 = vunpack.c.l.b16 %v475
        %v499 = vunpack.c.l.b16 %v476
        %v500 = vunpack.c.l.b16 %v477
        %v501 = vunpack.c.l.b16 %v478
        %v502 = vunpack.c.l.b16 %v479
        %v503 = vunpack.c.l.b16 %v480
        %v504 = vunpack.c.l.b16 %v481
        %v505 = vpack.c.b16 %v498, %v497
        %v506 = vpack.c.b16 %v500, %v499
        %v507 = vpack.c.b16 %v502, %v501
        %v508 = vpack.c.b16 %v504, %v503
        %vm513 = vcmask 523264
        %v515 = vsel %vm513, %v466, 0
        %v518 = vsel %vm513, %v467, 0
        %v521 = vsel %vm513, %v468, 0
        %v524 = vsel %vm513, %v469, 0
        %v527 = vsel %vm513, %v470, 0
        %v530 = vsel %vm513, %v471, 0
        %v533 = vsel %vm513, %v472, 0
        %v536 = vsel %vm513, %v473, 0
        %538 = vmatprep.subr.bf16.mxu0 0
        %539 = vmatpush1.bf16.msra.mxu0 %v505
        %540 = vmatprep.subr.bf16.mxu0 0
        %541 = vmatpush1.bf16.msra.mxu0 %v506
        %542 = vmatprep.subr.bf16.mxu0 0
        %543 = vmatpush1.bf16.msra.mxu0 %v507
        %544 = vmatprep.subr.bf16.mxu0 0
        %545 = vmatpush1.bf16.msra.mxu0 %v508
        %546 = vmatprep.subr.bf16.mxu0 0
        %547 = vmatpush1.bf16.msra.mxu0 0
        %548 = vmatprep.subr.bf16.mxu0 0
        %549 = vmatpush1.bf16.msra.mxu0 0
        %550 = vmatprep.subr.bf16.mxu0 0
        %551 = vmatpush1.bf16.msra.mxu0 0
        %552 = vmatprep.subr.bf16.mxu0 0
        %553 = vmatpush1.bf16.msra.mxu0 0
        %554 = vmatprep.subr.bf16.mxu0 0
        %555 = vmatpush1.bf16.msra.mxu0 0
        %556 = vmatprep.subr.bf16.mxu0 0
        %557 = vmatpush1.bf16.msra.mxu0 0
        %558 = vmatprep.subr.bf16.mxu0 0
        %559 = vmatpush1.bf16.msra.mxu0 0
        %560 = vmatprep.subr.bf16.mxu0 0
        %561 = vmatpush1.bf16.msra.mxu0 0
        %562 = vmatprep.subr.bf16.mxu0 0
        %563 = vmatpush1.bf16.msra.mxu0 0
        %564 = vmatprep.subr.bf16.mxu0 0
        %565 = vmatpush1.bf16.msra.mxu0 0
        %566 = vmatprep.subr.bf16.mxu0 0
        %567 = vmatpush1.bf16.msra.mxu0 0
        %568 = vmatprep.subr.bf16.mxu0 0
        %569 = vmatpush1.bf16.msra.mxu0 0
        %570 = vmatprep.mubr.bf16.mxu0 0
        %571 = vmatmul.mubr.bf16.gmra.mrb[0].mxu0 %v515
        %v572 = vpop.f32.mrb[0].mxu0
        %v573 = vadd.f32 %v487, %v572
        %v574 = vpop.f32.mrb[0].mxu0
        %v575 = vpop.f32.mrb[0].mxu0
        %v576 = vadd.f32 %v487, %v575
        %v577 = vpop.f32.mrb[0].mxu0
        %578 = vmatprep.mubr.bf16.mxu0 0
        %579 = vmatmul.mubr.bf16.gmra.mrb[0].mxu0 %v518
        %v580 = vpop.f32.mrb[0].mxu0
        %v581 = vadd.f32 %v487, %v580
        %v582 = vpop.f32.mrb[0].mxu0
        %v583 = vpop.f32.mrb[0].mxu0
        %v584 = vadd.f32 %v487, %v583
        %v585 = vpop.f32.mrb[0].mxu0
        %586 = vmatprep.mubr.bf16.mxu0 0
        %587 = vmatmul.mubr.bf16.gmra.mrb[0].mxu0 %v521
        %v588 = vpop.f32.mrb[0].mxu0
        %v589 = vadd.f32 %v487, %v588
        %v590 = vpop.f32.mrb[0].mxu0
        %v591 = vpop.f32.mrb[0].mxu0
        %v592 = vadd.f32 %v487, %v591
        %v593 = vpop.f32.mrb[0].mxu0
        %594 = vmatprep.mubr.bf16.mxu0 0
        %595 = vmatmul.mubr.bf16.gmra.mrb[0].mxu0 %v524
        %v596 = vpop.f32.mrb[0].mxu0
        %v597 = vadd.f32 %v487, %v596
        %v598 = vpop.f32.mrb[0].mxu0
        %v599 = vpop.f32.mrb[0].mxu0
        %v600 = vadd.f32 %v487, %v599
        %v601 = vpop.f32.mrb[0].mxu0
        %602 = vmatprep.mubr.bf16.mxu0 0
        %603 = vmatmul.mubr.bf16.gmra.mrb[0].mxu0 %v527
        %v604 = vpop.f32.mrb[0].mxu0
        %v605 = vadd.f32 %v487, %v604
        %v606 = vpop.f32.mrb[0].mxu0
        %v607 = vpop.f32.mrb[0].mxu0
        %v608 = vadd.f32 %v487, %v607
        %v609 = vpop.f32.mrb[0].mxu0
        %610 = vmatprep.mubr.bf16.mxu0 0
        %611 = vmatmul.mubr.bf16.gmra.mrb[0].mxu0 %v530
        %v612 = vpop.f32.mrb[0].mxu0
        %v613 = vadd.f32 %v487, %v612
        %v614 = vpop.f32.mrb[0].mxu0
        %v615 = vpop.f32.mrb[0].mxu0
        %v616 = vadd.f32 %v487, %v615
        %v617 = vpop.f32.mrb[0].mxu0
        %618 = vmatprep.mubr.bf16.mxu0 0
        %619 = vmatmul.mubr.bf16.gmra.mrb[0].mxu0 %v533
        %v620 = vpop.f32.mrb[0].mxu0
        %v621 = vadd.f32 %v487, %v620
        %v622 = vpop.f32.mrb[0].mxu0
        %v623 = vpop.f32.mrb[0].mxu0
        %v624 = vadd.f32 %v487, %v623
        %v625 = vpop.f32.mrb[0].mxu0
        %626 = vmatprep.mubr.bf16.mxu0 0
        %627 = vmatmul.mubr.bf16.gmra.mrb[0].mxu0 %v536
        %v628 = vpop.f32.mrb[0].mxu0
        %v629 = vadd.f32 %v487, %v628
        %v630 = vpop.f32.mrb[0].mxu0
        %v631 = vpop.f32.mrb[0].mxu0
        %v632 = vadd.f32 %v487, %v631
        %v633 = vpop.f32.mrb[0].mxu0
        %634 = vdwg.mxu0
        %v635 = vmax.f32 %v573, 0.0
        %v636 = vmax.f32 %v576, 0.0
        %v637 = vmax.f32 %v581, 0.0
        %v638 = vmax.f32 %v584, 0.0
        %v639 = vmax.f32 %v589, 0.0
        %v640 = vmax.f32 %v592, 0.0
        %v641 = vmax.f32 %v597, 0.0
        %v642 = vmax.f32 %v600, 0.0
        %v643 = vmax.f32 %v605, 0.0
        %v644 = vmax.f32 %v608, 0.0
        %v645 = vmax.f32 %v613, 0.0
        %v646 = vmax.f32 %v616, 0.0
        %v647 = vmax.f32 %v621, 0.0
        %v648 = vmax.f32 %v624, 0.0
        %v649 = vmax.f32 %v629, 0.0
        %v650 = vmax.f32 %v632, 0.0
        %v651 = vpack.c.bf16 %v636, %v635
        %v652 = vpack.c.bf16 %v638, %v637
        %v653 = vpack.c.bf16 %v640, %v639
        %v654 = vpack.c.bf16 %v642, %v641
        %v655 = vpack.c.bf16 %v644, %v643
        %v656 = vpack.c.bf16 %v646, %v645
        %v657 = vpack.c.bf16 %v648, %v647
        %v658 = vpack.c.bf16 %v650, %v649
        %v659 = vld [vmem:[%s3] sm:$0xf]
        %v660 = vld [vmem:[%s3 + $0x4] sm:$0xf]
        %v661 = vld [vmem:[%s3 + $0x8] sm:$0xf]
        %v662 = vld [vmem:[%s3 + $0xc] sm:$0xf]
        %v663 = vld [vmem:[%s3 + $0x10] sm:$0xf]
        %v664 = vld [vmem:[%s3 + $0x14] sm:$0xf]
        %v665 = vld [vmem:[%s3 + $0x18] sm:$0xf]
        %v666 = vld [vmem:[%s3 + $0x1c] sm:$0xf]
        %v667 = vld [vmem:[%s6] sm:$0x1]
        %v669 = vlaneseq
        %v670 = vshrl.u32 %v669, 7
        %v671 = vsub.s32 0, %v670
        %v672 = vrot.slane %v667, %v671
        %v682 = vunpack.c.l.b16 %v659
        %v683 = vunpack.c.l.b16 %v660
        %v684 = vunpack.c.l.b16 %v661
        %v685 = vunpack.c.l.b16 %v662
        %v686 = vunpack.c.l.b16 %v663
        %v687 = vunpack.c.l.b16 %v664
        %v688 = vunpack.c.l.b16 %v665
        %v689 = vunpack.c.l.b16 %v666
        %v690 = vpack.c.b16 %v683, %v682
        %v691 = vpack.c.b16 %v685, %v684
        %v692 = vpack.c.b16 %v687, %v686
        %v693 = vpack.c.b16 %v689, %v688
        %v699 = vsel %vm513, %v651, 0
        %v702 = vsel %vm513, %v652, 0
        %v705 = vsel %vm513, %v653, 0
        %v708 = vsel %vm513, %v654, 0
        %v711 = vsel %vm513, %v655, 0
        %v714 = vsel %vm513, %v656, 0
        %v717 = vsel %vm513, %v657, 0
        %v720 = vsel %vm513, %v658, 0
        %722 = vmatprep.subr.bf16.mxu0 0
        %723 = vmatpush1.bf16.msra.mxu0 %v690
        %724 = vmatprep.subr.bf16.mxu0 0
        %725 = vmatpush1.bf16.msra.mxu0 %v691
        %726 = vmatprep.subr.bf16.mxu0 0
        %727 = vmatpush1.bf16.msra.mxu0 %v692
        %728 = vmatprep.subr.bf16.mxu0 0
        %729 = vmatpush1.bf16.msra.mxu0 %v693
        %730 = vmatprep.subr.bf16.mxu0 0
        %731 = vmatpush1.bf16.msra.mxu0 0
        %732 = vmatprep.subr.bf16.mxu0 0
        %733 = vmatpush1.bf16.msra.mxu0 0
        %734 = vmatprep.subr.bf16.mxu0 0
        %735 = vmatpush1.bf16.msra.mxu0 0
        %736 = vmatprep.subr.bf16.mxu0 0
        %737 = vmatpush1.bf16.msra.mxu0 0
        %738 = vmatprep.subr.bf16.mxu0 0
        %739 = vmatpush1.bf16.msra.mxu0 0
        %740 = vmatprep.subr.bf16.mxu0 0
        %741 = vmatpush1.bf16.msra.mxu0 0
        %742 = vmatprep.subr.bf16.mxu0 0
        %743 = vmatpush1.bf16.msra.mxu0 0
        %744 = vmatprep.subr.bf16.mxu0 0
        %745 = vmatpush1.bf16.msra.mxu0 0
        %746 = vmatprep.subr.bf16.mxu0 0
        %747 = vmatpush1.bf16.msra.mxu0 0
        %748 = vmatprep.subr.bf16.mxu0 0
        %749 = vmatpush1.bf16.msra.mxu0 0
        %750 = vmatprep.subr.bf16.mxu0 0
        %751 = vmatpush1.bf16.msra.mxu0 0
        %752 = vmatprep.subr.bf16.mxu0 0
        %753 = vmatpush1.bf16.msra.mxu0 0
        %754 = vmatprep.mubr.bf16.mxu0 0
        %755 = vmatmul.mubr.bf16.gmra.mrb[0].mxu0 %v699
        %v756 = vpop.f32.mrb[0].mxu0
        %v757 = vadd.f32 %v672, %v756
        %v758 = vpop.f32.mrb[0].mxu0
        %v759 = vpop.f32.mrb[0].mxu0
        %v760 = vadd.f32 %v672, %v759
        %v761 = vpop.f32.mrb[0].mxu0
        %762 = vmatprep.mubr.bf16.mxu0 0
        %763 = vmatmul.mubr.bf16.gmra.mrb[0].mxu0 %v702
        %v764 = vpop.f32.mrb[0].mxu0
        %v765 = vadd.f32 %v672, %v764
        %v766 = vpop.f32.mrb[0].mxu0
        %v767 = vpop.f32.mrb[0].mxu0
        %v768 = vadd.f32 %v672, %v767
        %v769 = vpop.f32.mrb[0].mxu0
        %770 = vmatprep.mubr.bf16.mxu0 0
        %771 = vmatmul.mubr.bf16.gmra.mrb[0].mxu0 %v705
        %v772 = vpop.f32.mrb[0].mxu0
        %v773 = vadd.f32 %v672, %v772
        %v774 = vpop.f32.mrb[0].mxu0
        %v775 = vpop.f32.mrb[0].mxu0
        %v776 = vadd.f32 %v672, %v775
        %v777 = vpop.f32.mrb[0].mxu0
        %778 = vmatprep.mubr.bf16.mxu0 0
        %779 = vmatmul.mubr.bf16.gmra.mrb[0].mxu0 %v708
        %v780 = vpop.f32.mrb[0].mxu0
        %v781 = vadd.f32 %v672, %v780
        %v782 = vpop.f32.mrb[0].mxu0
        %v783 = vpop.f32.mrb[0].mxu0
        %v784 = vadd.f32 %v672, %v783
        %v785 = vpop.f32.mrb[0].mxu0
        %786 = vmatprep.mubr.bf16.mxu0 0
        %787 = vmatmul.mubr.bf16.gmra.mrb[0].mxu0 %v711
        %v788 = vpop.f32.mrb[0].mxu0
        %v789 = vadd.f32 %v672, %v788
        %v790 = vpop.f32.mrb[0].mxu0
        %v791 = vpop.f32.mrb[0].mxu0
        %v792 = vadd.f32 %v672, %v791
        %v793 = vpop.f32.mrb[0].mxu0
        %794 = vmatprep.mubr.bf16.mxu0 0
        %795 = vmatmul.mubr.bf16.gmra.mrb[0].mxu0 %v714
        %v796 = vpop.f32.mrb[0].mxu0
        %v797 = vadd.f32 %v672, %v796
        %v798 = vpop.f32.mrb[0].mxu0
        %v799 = vpop.f32.mrb[0].mxu0
        %v800 = vadd.f32 %v672, %v799
        %v801 = vpop.f32.mrb[0].mxu0
        %802 = vmatprep.mubr.bf16.mxu0 0
        %803 = vmatmul.mubr.bf16.gmra.mrb[0].mxu0 %v717
        %v804 = vpop.f32.mrb[0].mxu0
        %v805 = vadd.f32 %v672, %v804
        %v806 = vpop.f32.mrb[0].mxu0
        %v807 = vpop.f32.mrb[0].mxu0
        %v808 = vadd.f32 %v672, %v807
        %v809 = vpop.f32.mrb[0].mxu0
        %810 = vmatprep.mubr.bf16.mxu0 0
        %811 = vmatmul.mubr.bf16.gmra.mrb[0].mxu0 %v720
        %v812 = vpop.f32.mrb[0].mxu0
        %v813 = vadd.f32 %v672, %v812
        %v814 = vpop.f32.mrb[0].mxu0
        %v815 = vpop.f32.mrb[0].mxu0
        %v816 = vadd.f32 %v672, %v815
        %v817 = vpop.f32.mrb[0].mxu0
        %818 = vdwg.mxu0
        %v819 = vsub.f32 0.0, %v757
        %v820 = vsub.f32 0.0, %v760
        %v821 = vsub.f32 0.0, %v765
        %v822 = vsub.f32 0.0, %v768
        %v823 = vsub.f32 0.0, %v773
        %v824 = vsub.f32 0.0, %v776
        %v825 = vsub.f32 0.0, %v781
        %v826 = vsub.f32 0.0, %v784
        %v827 = vsub.f32 0.0, %v789
        %v828 = vsub.f32 0.0, %v792
        %v829 = vsub.f32 0.0, %v797
        %v830 = vsub.f32 0.0, %v800
        %v831 = vsub.f32 0.0, %v805
        %v832 = vsub.f32 0.0, %v808
        %v833 = vsub.f32 0.0, %v813
        %v834 = vsub.f32 0.0, %v816
        %v835 = vmul.f32 %v819, 1.442695
        %v836 = vpow.pop %v835
        %v837 = vmul.f32 %v820, 1.442695
        %v838 = vpow.pop %v837
        %v839 = vmul.f32 %v821, 1.442695
        %v840 = vpow.pop %v839
        %v841 = vmul.f32 %v822, 1.442695
        %v842 = vpow.pop %v841
        %v843 = vmul.f32 %v823, 1.442695
        %v844 = vpow.pop %v843
        %v845 = vmul.f32 %v824, 1.442695
        %v846 = vpow.pop %v845
        %v847 = vmul.f32 %v825, 1.442695
        %v848 = vpow.pop %v847
        %v849 = vmul.f32 %v826, 1.442695
        %v850 = vpow.pop %v849
        %v851 = vmul.f32 %v827, 1.442695
        %v852 = vpow.pop %v851
        %v853 = vmul.f32 %v828, 1.442695
        %v854 = vpow.pop %v853
        %v855 = vmul.f32 %v829, 1.442695
        %v856 = vpow.pop %v855
        %v857 = vmul.f32 %v830, 1.442695
        %v858 = vpow.pop %v857
        %v859 = vmul.f32 %v831, 1.442695
        %v860 = vpow.pop %v859
        %v861 = vmul.f32 %v832, 1.442695
        %v862 = vpow.pop %v861
        %v863 = vmul.f32 %v833, 1.442695
        %v864 = vpow.pop %v863
        %v865 = vmul.f32 %v834, 1.442695
        %v866 = vpow.pop %v865
        %v867 = vadd.f32 %v836, 1.0
        %v868 = vadd.f32 %v838, 1.0
        %v869 = vadd.f32 %v840, 1.0
        %v870 = vadd.f32 %v842, 1.0
        %v871 = vadd.f32 %v844, 1.0
        %v872 = vadd.f32 %v846, 1.0
        %v873 = vadd.f32 %v848, 1.0
        %v874 = vadd.f32 %v850, 1.0
        %v875 = vadd.f32 %v852, 1.0
        %v876 = vadd.f32 %v854, 1.0
        %v877 = vadd.f32 %v856, 1.0
        %v878 = vadd.f32 %v858, 1.0
        %v879 = vadd.f32 %v860, 1.0
        %v880 = vadd.f32 %v862, 1.0
        %v881 = vadd.f32 %v864, 1.0
        %v882 = vadd.f32 %v866, 1.0
        %v883 = vrcp.pop %v867
        %v884 = vrcp.pop %v868
        %v885 = vrcp.pop %v869
        %v886 = vrcp.pop %v870
        %v887 = vrcp.pop %v871
        %v888 = vrcp.pop %v872
        %v889 = vrcp.pop %v873
        %v890 = vrcp.pop %v874
        %v891 = vrcp.pop %v875
        %v892 = vrcp.pop %v876
        %v893 = vrcp.pop %v877
        %v894 = vrcp.pop %v878
        %v895 = vrcp.pop %v879
        %v896 = vrcp.pop %v880
        %v897 = vrcp.pop %v881
        %v898 = vrcp.pop %v882
        %899 = vst [vmem:[%s272] sm:$0xff] %v883
        %900 = vst [vmem:[%s272 + $0x8] sm:$0xff] %v884
        %901 = vst [vmem:[%s272 + $0x10] sm:$0xff] %v885
        %902 = vst [vmem:[%s272 + $0x18] sm:$0xff] %v886
        %903 = vst [vmem:[%s272 + $0x20] sm:$0xff] %v887
        %904 = vst [vmem:[%s272 + $0x28] sm:$0xff] %v888
        %905 = vst [vmem:[%s272 + $0x30] sm:$0xff] %v889
        %906 = vst [vmem:[%s272 + $0x38] sm:$0xff] %v890
        %907 = vst [vmem:[%s272 + $0x40] sm:$0xff] %v891
        %908 = vst [vmem:[%s272 + $0x48] sm:$0xff] %v892
        %909 = vst [vmem:[%s272 + $0x50] sm:$0xff] %v893
        %910 = vst [vmem:[%s272 + $0x58] sm:$0xff] %v894
        %911 = vst [vmem:[%s272 + $0x60] sm:$0xff] %v895
        %912 = vst [vmem:[%s272 + $0x68] sm:$0xff] %v896
        %913 = vst [vmem:[%s272 + $0x70] sm:$0xff] %v897
        %914 = vst [vmem:[%s272 + $0x78] sm:$0xff] %v898
        %s915 = sand.u32 %s181, 1
        %s916 = scalar_lea.sflag [#allocation3], %s915
        %s917 = sand.u32 %s181, 1
        %s918 = smul.addr %s917, 128
        %s919 = scalar_lea.vmem [#allocation2], %s918
        // Predicated region
        $region49: #{tpu_custom_call.1} parent=47 // pred_check
          %p920 = pneg %p191
        $region50: #{tpu_custom_call.1} parent=47 // pred_check_branch
          %922 = sbr.rel (%p920) target = $region52
        $region51: #{tpu_custom_call.1} parent=47 // pred_region
          %s923 = smul.u32 16, %s21
          %s925 = ssub.s32 2048, 2048
          %926 = vsyncadd %s916, %s925
          %s927 = smul.addr %s923, 128
          %s928 = scalar_lea.hbm %s7, %s927
          %s929 = sshll.u32 %s919, 4
          %s930 = int_to_ptr.vmem [resolvable:$true] %s929
          %935 = dma.vmem_to_hbm [thread:$0]  %s930, 2048, %s928, %s916, 128, 128, 8
        $region52: #{tpu_custom_call.1} parent=47 // pred_fallthru
          _
      $region48: #{tpu_custom_call.1} parent=5 // pred_fallthru
        _
      %p936 = scmp.le.s32.totalorder 2, %s16
      // Predicated region
      $region53: #{tpu_custom_call.1} parent=5 // pred_check
        %p937 = pneg %p936
      $region54: #{tpu_custom_call.1} parent=5 // pred_check_branch
        %939 = sbr.rel (%p937) target = $region56
      $region55: #{tpu_custom_call.1} parent=5 // pred_region
        %s940 = ssub.s32 %s16, 2
        // Predicated region
        $region57: #{tpu_custom_call.1} parent=55 // pred_check
          %p941 = pneg %p197
        $region58: #{tpu_custom_call.1} parent=55 // pred_check_branch
          %943 = sbr.rel (%p941) target = $region60
        $region59: #{tpu_custom_call.1} parent=55 // pred_region
          %s944 = sand.u32 %s182, 1
          %s945 = scalar_lea.sflag [#allocation3], %s944
          %s946 = sand.u32 %s182, 1
          %s947 = smul.addr %s946, 128
          %s948 = scalar_lea.vmem [#allocation2], %s947
          %949 = dma.done %s945, 2048
        $region60: #{tpu_custom_call.1} parent=55 // pred_fallthru
          _
      $region56: #{tpu_custom_call.1} parent=5 // pred_fallthru
        _
    $region6: #{tpu_custom_call.1} parent=1 // loop_footer
      %s20 = sadd.s32 1, %s16
    $region7: #{tpu_custom_call.1} parent=1 // loop_footer_branch
      %15 = sbr.rel target = $region3
    $region8: #{tpu_custom_call.1} parent=1 // loop_exit
      _
    %950 = vsyncpa [#allocation3], 1
    %s951 = scalar_lea.sflag [#allocation3], 1
    %952 = vsyncpa %s951, 1

</llo_original>
